<compile_context>
chip_gen: v7x
topology: tpu7x:2x2x1
jax: 0.10.0
libtpu: 0.0.40
codegen_flags: <defaults>
</compile_context>

<pallas_src>
import math

import jax
import jax.numpy as jnp
from jax.experimental import pallas as pl
from jax.experimental.pallas import tpu as pltpu

_HIDDEN = 10


def _mlp_kernel(x_ref,
                w1_ref, b1_ref,
                w2_ref, b2_ref,
                w3_ref, b3_ref,
                w4_ref, b4_ref,
                o_ref):
    # x_ref: (1, TILE_M)  -- batch on lanes.
    x = x_ref[...]

    # Layer 1 (in_features=1): pure VPU broadcast-MAC, no matmul.
    #   h[j, n] = w1[j, 0] * x[0, n] + b1[j, 0]
    h = jnp.maximum(w1_ref[...] * x + b1_ref[...], 0.0)          # (10, TILE_M)

    # Layers 2 & 3: (10,10) x (10,TILE_M) as 10 unrolled broadcast-MAC steps on the VPU.
    # Accumulator starts as the broadcast bias (fuses the bias add into the MAC chain).
    for w_ref, b_ref in ((w2_ref, b2_ref), (w3_ref, b3_ref)):
        w = w_ref[...]                                           # (10, 10), (out, in)
        acc = jnp.broadcast_to(b_ref[...], h.shape)              # (10, TILE_M)
        for k in range(_HIDDEN):
            acc = acc + w[:, k:k + 1] * h[k:k + 1, :]
        h = jnp.maximum(acc, 0.0)

    # Layer 4 (out_features=1): vmul + sublane reduction (XLU); output stays lane-dense.
    y = jnp.sum(w4_ref[...] * h, axis=0, keepdims=True) + b4_ref[...]   # (1, TILE_M)
    o_ref[...] = y


def rede_neural_forward(x, params, tile_m=512):
    """x: (batch, 1) float32.  params: dict in kernel layout (see init_params)."""
    batch = x.shape[0]
    assert x.shape == (batch, 1)

    # Tile is a multiple of 128 lanes, capped at 512 (VMEM-safe on v5e/v6e/v7x).
    tile_m = min(tile_m, max(128, pl.cdiv(batch, 128) * 128))
    padded = pl.cdiv(batch, tile_m) * tile_m

    x_row = x.reshape(1, batch).astype(jnp.float32)
    if padded != batch:
        x_row = jnp.pad(x_row, ((0, 0), (0, padded - batch)))    # rows are independent

    vmem = pltpu.MemorySpace.VMEM

    def full_block(shape):
        # Weights/biases: single full block, VMEM-resident across all grid steps.
        return pl.BlockSpec(shape, lambda i: (0, 0), memory_space=vmem)

    out = pl.pallas_call(
        _mlp_kernel,
        out_shape=jax.ShapeDtypeStruct((1, padded), jnp.float32),
        grid=(padded // tile_m,),
        in_specs=[
            pl.BlockSpec((1, tile_m), lambda i: (0, i), memory_space=vmem),  # x stream
            full_block((_HIDDEN, 1)), full_block((_HIDDEN, 1)),              # w1, b1
            full_block((_HIDDEN, _HIDDEN)), full_block((_HIDDEN, 1)),        # w2, b2
            full_block((_HIDDEN, _HIDDEN)), full_block((_HIDDEN, 1)),        # w3, b3
            full_block((_HIDDEN, 1)), full_block((1, 1)),                    # w4, b4
        ],
        out_specs=pl.BlockSpec((1, tile_m), lambda i: (0, i), memory_space=vmem),
        compiler_params=pltpu.CompilerParams(
            dimension_semantics=("parallel",)),   # v7x: shard batch tiles across both TCs
    )(x_row,
      params["w1"], params["b1"],
      params["w2"], params["b2"],
      params["w3"], params["b3"],
      params["w4"], params["b4"])

    return out[0, :batch].reshape(batch, 1)


def init_params(key):
    """Kernel-layout parameters, init mimicking PyTorch Linear U(-1/sqrt(fan_in), 1/sqrt(fan_in)).

    Layout mapping from PyTorch:
      w1, w2, w3 : PyTorch weight (out_features, in_features), stored as-is.
      w4         : PyTorch weight (1, 10) stored transposed as a (10, 1) column.
      b1..b3     : PyTorch bias (out,) stored as a (out, 1) column; b4 stored as (1, 1).
    """
    specs = {
        "w1": ((_HIDDEN, 1), 1),        "b1": ((_HIDDEN, 1), 1),
        "w2": ((_HIDDEN, _HIDDEN), 10), "b2": ((_HIDDEN, 1), 10),
        "w3": ((_HIDDEN, _HIDDEN), 10), "b3": ((_HIDDEN, 1), 10),
        "w4": ((_HIDDEN, 1), 10),       "b4": ((1, 1), 10),
    }
    params = {}
    for name, (shape, fan_in) in specs.items():
        key, sub = jax.random.split(key)
        bound = 1.0 / math.sqrt(fan_in)
        params[name] = jax.random.uniform(
            sub, shape, jnp.float32, minval=-bound, maxval=bound)
    return params


def _reference_forward(x, params):
    """Pure-JAX reference in the PyTorch convention (exact f32 matmuls)."""
    hp = jax.lax.Precision.HIGHEST
    h = jnp.maximum(jnp.dot(x, params["w1"].T, precision=hp) + params["b1"].T, 0.0)
    h = jnp.maximum(jnp.dot(h, params["w2"].T, precision=hp) + params["b2"].T, 0.0)
    h = jnp.maximum(jnp.dot(h, params["w3"].T, precision=hp) + params["b3"].T, 0.0)
    return jnp.dot(h, params["w4"], precision=hp) + params["b4"]


if __name__ == "__main__":
    key = jax.random.PRNGKey(0)
    key, kx = jax.random.split(key)
    params = init_params(key)

    # Small case (matches the original script's regime).
    batch = 8
    x = jax.random.normal(kx, (batch, 1), jnp.float32)
    out = jax.block_until_ready(rede_neural_forward(x, params))
    ref = _reference_forward(x, params)
    assert out.shape == (batch, 1), out.shape
    assert jnp.allclose(out, ref, atol=1e-5, rtol=1e-5), "mismatch vs JAX reference (small)"

    # Larger case exercising the batch grid (2 tiles) and tail padding.
    key, kx2 = jax.random.split(key)
    x2 = jax.random.normal(kx2, (640, 1), jnp.float32)
    out2 = jax.block_until_ready(rede_neural_forward(x2, params))
    ref2 = _reference_forward(x2, params)
    assert out2.shape == (640, 1), out2.shape
    assert jnp.allclose(out2, ref2, atol=1e-5, rtol=1e-5), "mismatch vs JAX reference (grid)"

    print("KERNEL_OK")
</pallas_src>

<mosaic_0001>
module attributes {stable_mosaic.version = 11 : i64} {
  func.func @_mlp_kernel(%arg0: i32, %arg1: memref<1x128xf32, #tpu.memory_space<vmem>>, %arg2: memref<10x1xf32, #tpu.memory_space<vmem>>, %arg3: memref<10x1xf32, #tpu.memory_space<vmem>>, %arg4: memref<10x10xf32, #tpu.memory_space<vmem>>, %arg5: memref<10x1xf32, #tpu.memory_space<vmem>>, %arg6: memref<10x10xf32, #tpu.memory_space<vmem>>, %arg7: memref<10x1xf32, #tpu.memory_space<vmem>>, %arg8: memref<10x1xf32, #tpu.memory_space<vmem>>, %arg9: memref<1x1xf32, #tpu.memory_space<vmem>>, %arg10: memref<1x128xf32, #tpu.memory_space<vmem>>) attributes {dimension_semantics = [#tpu.dimension_semantics<parallel>], iteration_bounds = array<i64: 1>, scalar_prefetch = 0 : i64, scratch_operands = 0 : i64, tpu.core_type = #tpu.core_type<tc>, window_params = [{transform_indices = @transform_0, window_bounds = array<i64: 1, 128>}, {pipeline_mode = #tpu.pipeline_mode<synchronous>, transform_indices = @transform_1, window_bounds = array<i64: 10, 1>}, {pipeline_mode = #tpu.pipeline_mode<synchronous>, transform_indices = @transform_2, window_bounds = array<i64: 10, 1>}, {pipeline_mode = #tpu.pipeline_mode<synchronous>, transform_indices = @transform_3, window_bounds = array<i64: 10, 10>}, {pipeline_mode = #tpu.pipeline_mode<synchronous>, transform_indices = @transform_4, window_bounds = array<i64: 10, 1>}, {pipeline_mode = #tpu.pipeline_mode<synchronous>, transform_indices = @transform_5, window_bounds = array<i64: 10, 10>}, {pipeline_mode = #tpu.pipeline_mode<synchronous>, transform_indices = @transform_6, window_bounds = array<i64: 10, 1>}, {pipeline_mode = #tpu.pipeline_mode<synchronous>, transform_indices = @transform_7, window_bounds = array<i64: 10, 1>}, {pipeline_mode = #tpu.pipeline_mode<synchronous>, transform_indices = @transform_8, window_bounds = array<i64: 1, 1>}, {transform_indices = @transform_9, window_bounds = array<i64: 1, 128>}]} {
    %c0 = arith.constant 0 : index
    %c0_0 = arith.constant 0 : index
    %0 = vector.load %arg1[%c0, %c0_0] : memref<1x128xf32, #tpu.memory_space<vmem>>, vector<1x128xf32>
    %c0_1 = arith.constant 0 : index
    %c0_2 = arith.constant 0 : index
    %1 = vector.load %arg2[%c0_1, %c0_2] : memref<10x1xf32, #tpu.memory_space<vmem>>, vector<10x1xf32>
    %2 = vector.broadcast %1 : vector<10x1xf32> to vector<10x128xf32>
    %3 = vector.broadcast %0 : vector<1x128xf32> to vector<10x128xf32>
    %4 = arith.mulf %2, %3 : vector<10x128xf32>
    %c0_3 = arith.constant 0 : index
    %c0_4 = arith.constant 0 : index
    %5 = vector.load %arg3[%c0_3, %c0_4] : memref<10x1xf32, #tpu.memory_space<vmem>>, vector<10x1xf32>
    %6 = vector.broadcast %5 : vector<10x1xf32> to vector<10x128xf32>
    %7 = arith.addf %4, %6 : vector<10x128xf32>
    %cst = arith.constant 0.000000e+00 : f32
    %8 = vector.broadcast %cst : f32 to vector<10x128xf32>
    %9 = arith.maximumf %7, %8 : vector<10x128xf32>
    %c0_5 = arith.constant 0 : index
    %c0_6 = arith.constant 0 : index
    %10 = vector.load %arg4[%c0_5, %c0_6] : memref<10x10xf32, #tpu.memory_space<vmem>>, vector<10x10xf32>
    %c0_7 = arith.constant 0 : index
    %c0_8 = arith.constant 0 : index
    %11 = vector.load %arg5[%c0_7, %c0_8] : memref<10x1xf32, #tpu.memory_space<vmem>>, vector<10x1xf32>
    %12 = vector.shape_cast %11 : vector<10x1xf32> to vector<10x1xf32>
    %13 = vector.broadcast %12 : vector<10x1xf32> to vector<10x128xf32>
    %14 = vector.extract_strided_slice %10 {offsets = [0, 0], sizes = [10, 1], strides = [1, 1]} : vector<10x10xf32> to vector<10x1xf32>
    %15 = vector.extract_strided_slice %9 {offsets = [0, 0], sizes = [1, 128], strides = [1, 1]} : vector<10x128xf32> to vector<1x128xf32>
    %16 = vector.broadcast %14 : vector<10x1xf32> to vector<10x128xf32>
    %17 = vector.broadcast %15 : vector<1x128xf32> to vector<10x128xf32>
    %18 = arith.mulf %16, %17 : vector<10x128xf32>
    %19 = arith.addf %13, %18 : vector<10x128xf32>
    %20 = vector.extract_strided_slice %10 {offsets = [0, 1], sizes = [10, 1], strides = [1, 1]} : vector<10x10xf32> to vector<10x1xf32>
    %21 = vector.extract_strided_slice %9 {offsets = [1, 0], sizes = [1, 128], strides = [1, 1]} : vector<10x128xf32> to vector<1x128xf32>
    %22 = vector.broadcast %20 : vector<10x1xf32> to vector<10x128xf32>
    %23 = vector.broadcast %21 : vector<1x128xf32> to vector<10x128xf32>
    %24 = arith.mulf %22, %23 : vector<10x128xf32>
    %25 = arith.addf %19, %24 : vector<10x128xf32>
    %26 = vector.extract_strided_slice %10 {offsets = [0, 2], sizes = [10, 1], strides = [1, 1]} : vector<10x10xf32> to vector<10x1xf32>
    %27 = vector.extract_strided_slice %9 {offsets = [2, 0], sizes = [1, 128], strides = [1, 1]} : vector<10x128xf32> to vector<1x128xf32>
    %28 = vector.broadcast %26 : vector<10x1xf32> to vector<10x128xf32>
    %29 = vector.broadcast %27 : vector<1x128xf32> to vector<10x128xf32>
    %30 = arith.mulf %28, %29 : vector<10x128xf32>
    %31 = arith.addf %25, %30 : vector<10x128xf32>
    %32 = vector.extract_strided_slice %10 {offsets = [0, 3], sizes = [10, 1], strides = [1, 1]} : vector<10x10xf32> to vector<10x1xf32>
    %33 = vector.extract_strided_slice %9 {offsets = [3, 0], sizes = [1, 128], strides = [1, 1]} : vector<10x128xf32> to vector<1x128xf32>
    %34 = vector.broadcast %32 : vector<10x1xf32> to vector<10x128xf32>
    %35 = vector.broadcast %33 : vector<1x128xf32> to vector<10x128xf32>
    %36 = arith.mulf %34, %35 : vector<10x128xf32>
    %37 = arith.addf %31, %36 : vector<10x128xf32>
    %38 = vector.extract_strided_slice %10 {offsets = [0, 4], sizes = [10, 1], strides = [1, 1]} : vector<10x10xf32> to vector<10x1xf32>
    %39 = vector.extract_strided_slice %9 {offsets = [4, 0], sizes = [1, 128], strides = [1, 1]} : vector<10x128xf32> to vector<1x128xf32>
    %40 = vector.broadcast %38 : vector<10x1xf32> to vector<10x128xf32>
    %41 = vector.broadcast %39 : vector<1x128xf32> to vector<10x128xf32>
    %42 = arith.mulf %40, %41 : vector<10x128xf32>
    %43 = arith.addf %37, %42 : vector<10x128xf32>
    %44 = vector.extract_strided_slice %10 {offsets = [0, 5], sizes = [10, 1], strides = [1, 1]} : vector<10x10xf32> to vector<10x1xf32>
    %45 = vector.extract_strided_slice %9 {offsets = [5, 0], sizes = [1, 128], strides = [1, 1]} : vector<10x128xf32> to vector<1x128xf32>
    %46 = vector.broadcast %44 : vector<10x1xf32> to vector<10x128xf32>
    %47 = vector.broadcast %45 : vector<1x128xf32> to vector<10x128xf32>
    %48 = arith.mulf %46, %47 : vector<10x128xf32>
    %49 = arith.addf %43, %48 : vector<10x128xf32>
    %50 = vector.extract_strided_slice %10 {offsets = [0, 6], sizes = [10, 1], strides = [1, 1]} : vector<10x10xf32> to vector<10x1xf32>
    %51 = vector.extract_strided_slice %9 {offsets = [6, 0], sizes = [1, 128], strides = [1, 1]} : vector<10x128xf32> to vector<1x128xf32>
    %52 = vector.broadcast %50 : vector<10x1xf32> to vector<10x128xf32>
    %53 = vector.broadcast %51 : vector<1x128xf32> to vector<10x128xf32>
    %54 = arith.mulf %52, %53 : vector<10x128xf32>
    %55 = arith.addf %49, %54 : vector<10x128xf32>
    %56 = vector.extract_strided_slice %10 {offsets = [0, 7], sizes = [10, 1], strides = [1, 1]} : vector<10x10xf32> to vector<10x1xf32>
    %57 = vector.extract_strided_slice %9 {offsets = [7, 0], sizes = [1, 128], strides = [1, 1]} : vector<10x128xf32> to vector<1x128xf32>
    %58 = vector.broadcast %56 : vector<10x1xf32> to vector<10x128xf32>
    %59 = vector.broadcast %57 : vector<1x128xf32> to vector<10x128xf32>
    %60 = arith.mulf %58, %59 : vector<10x128xf32>
    %61 = arith.addf %55, %60 : vector<10x128xf32>
    %62 = vector.extract_strided_slice %10 {offsets = [0, 8], sizes = [10, 1], strides = [1, 1]} : vector<10x10xf32> to vector<10x1xf32>
    %63 = vector.extract_strided_slice %9 {offsets = [8, 0], sizes = [1, 128], strides = [1, 1]} : vector<10x128xf32> to vector<1x128xf32>
    %64 = vector.broadcast %62 : vector<10x1xf32> to vector<10x128xf32>
    %65 = vector.broadcast %63 : vector<1x128xf32> to vector<10x128xf32>
    %66 = arith.mulf %64, %65 : vector<10x128xf32>
    %67 = arith.addf %61, %66 : vector<10x128xf32>
    %68 = vector.extract_strided_slice %10 {offsets = [0, 9], sizes = [10, 1], strides = [1, 1]} : vector<10x10xf32> to vector<10x1xf32>
    %69 = vector.extract_strided_slice %9 {offsets = [9, 0], sizes = [1, 128], strides = [1, 1]} : vector<10x128xf32> to vector<1x128xf32>
    %70 = vector.broadcast %68 : vector<10x1xf32> to vector<10x128xf32>
    %71 = vector.broadcast %69 : vector<1x128xf32> to vector<10x128xf32>
    %72 = arith.mulf %70, %71 : vector<10x128xf32>
    %73 = arith.addf %67, %72 : vector<10x128xf32>
    %cst_9 = arith.constant 0.000000e+00 : f32
    %74 = vector.broadcast %cst_9 : f32 to vector<10x128xf32>
    %75 = arith.maximumf %73, %74 : vector<10x128xf32>
    %c0_10 = arith.constant 0 : index
    %c0_11 = arith.constant 0 : index
    %76 = vector.load %arg6[%c0_10, %c0_11] : memref<10x10xf32, #tpu.memory_space<vmem>>, vector<10x10xf32>
    %c0_12 = arith.constant 0 : index
    %c0_13 = arith.constant 0 : index
    %77 = vector.load %arg7[%c0_12, %c0_13] : memref<10x1xf32, #tpu.memory_space<vmem>>, vector<10x1xf32>
    %78 = vector.shape_cast %77 : vector<10x1xf32> to vector<10x1xf32>
    %79 = vector.broadcast %78 : vector<10x1xf32> to vector<10x128xf32>
    %80 = vector.extract_strided_slice %76 {offsets = [0, 0], sizes = [10, 1], strides = [1, 1]} : vector<10x10xf32> to vector<10x1xf32>
    %81 = vector.extract_strided_slice %75 {offsets = [0, 0], sizes = [1, 128], strides = [1, 1]} : vector<10x128xf32> to vector<1x128xf32>
    %82 = vector.broadcast %80 : vector<10x1xf32> to vector<10x128xf32>
    %83 = vector.broadcast %81 : vector<1x128xf32> to vector<10x128xf32>
    %84 = arith.mulf %82, %83 : vector<10x128xf32>
    %85 = arith.addf %79, %84 : vector<10x128xf32>
    %86 = vector.extract_strided_slice %76 {offsets = [0, 1], sizes = [10, 1], strides = [1, 1]} : vector<10x10xf32> to vector<10x1xf32>
    %87 = vector.extract_strided_slice %75 {offsets = [1, 0], sizes = [1, 128], strides = [1, 1]} : vector<10x128xf32> to vector<1x128xf32>
    %88 = vector.broadcast %86 : vector<10x1xf32> to vector<10x128xf32>
    %89 = vector.broadcast %87 : vector<1x128xf32> to vector<10x128xf32>
    %90 = arith.mulf %88, %89 : vector<10x128xf32>
    %91 = arith.addf %85, %90 : vector<10x128xf32>
    %92 = vector.extract_strided_slice %76 {offsets = [0, 2], sizes = [10, 1], strides = [1, 1]} : vector<10x10xf32> to vector<10x1xf32>
    %93 = vector.extract_strided_slice %75 {offsets = [2, 0], sizes = [1, 128], strides = [1, 1]} : vector<10x128xf32> to vector<1x128xf32>
    %94 = vector.broadcast %92 : vector<10x1xf32> to vector<10x128xf32>
    %95 = vector.broadcast %93 : vector<1x128xf32> to vector<10x128xf32>
    %96 = arith.mulf %94, %95 : vector<10x128xf32>
    %97 = arith.addf %91, %96 : vector<10x128xf32>
    %98 = vector.extract_strided_slice %76 {offsets = [0, 3], sizes = [10, 1], strides = [1, 1]} : vector<10x10xf32> to vector<10x1xf32>
    %99 = vector.extract_strided_slice %75 {offsets = [3, 0], sizes = [1, 128], strides = [1, 1]} : vector<10x128xf32> to vector<1x128xf32>
    %100 = vector.broadcast %98 : vector<10x1xf32> to vector<10x128xf32>
    %101 = vector.broadcast %99 : vector<1x128xf32> to vector<10x128xf32>
    %102 = arith.mulf %100, %101 : vector<10x128xf32>
    %103 = arith.addf %97, %102 : vector<10x128xf32>
    %104 = vector.extract_strided_slice %76 {offsets = [0, 4], sizes = [10, 1], strides = [1, 1]} : vector<10x10xf32> to vector<10x1xf32>
    %105 = vector.extract_strided_slice %75 {offsets = [4, 0], sizes = [1, 128], strides = [1, 1]} : vector<10x128xf32> to vector<1x128xf32>
    %106 = vector.broadcast %104 : vector<10x1xf32> to vector<10x128xf32>
    %107 = vector.broadcast %105 : vector<1x128xf32> to vector<10x128xf32>
    %108 = arith.mulf %106, %107 : vector<10x128xf32>
    %109 = arith.addf %103, %108 : vector<10x128xf32>
    %110 = vector.extract_strided_slice %76 {offsets = [0, 5], sizes = [10, 1], strides = [1, 1]} : vector<10x10xf32> to vector<10x1xf32>
    %111 = vector.extract_strided_slice %75 {offsets = [5, 0], sizes = [1, 128], strides = [1, 1]} : vector<10x128xf32> to vector<1x128xf32>
    %112 = vector.broadcast %110 : vector<10x1xf32> to vector<10x128xf32>
    %113 = vector.broadcast %111 : vector<1x128xf32> to vector<10x128xf32>
    %114 = arith.mulf %112, %113 : vector<10x128xf32>
    %115 = arith.addf %109, %114 : vector<10x128xf32>
    %116 = vector.extract_strided_slice %76 {offsets = [0, 6], sizes = [10, 1], strides = [1, 1]} : vector<10x10xf32> to vector<10x1xf32>
    %117 = vector.extract_strided_slice %75 {offsets = [6, 0], sizes = [1, 128], strides = [1, 1]} : vector<10x128xf32> to vector<1x128xf32>
    %118 = vector.broadcast %116 : vector<10x1xf32> to vector<10x128xf32>
    %119 = vector.broadcast %117 : vector<1x128xf32> to vector<10x128xf32>
    %120 = arith.mulf %118, %119 : vector<10x128xf32>
    %121 = arith.addf %115, %120 : vector<10x128xf32>
    %122 = vector.extract_strided_slice %76 {offsets = [0, 7], sizes = [10, 1], strides = [1, 1]} : vector<10x10xf32> to vector<10x1xf32>
    %123 = vector.extract_strided_slice %75 {offsets = [7, 0], sizes = [1, 128], strides = [1, 1]} : vector<10x128xf32> to vector<1x128xf32>
    %124 = vector.broadcast %122 : vector<10x1xf32> to vector<10x128xf32>
    %125 = vector.broadcast %123 : vector<1x128xf32> to vector<10x128xf32>
    %126 = arith.mulf %124, %125 : vector<10x128xf32>
    %127 = arith.addf %121, %126 : vector<10x128xf32>
    %128 = vector.extract_strided_slice %76 {offsets = [0, 8], sizes = [10, 1], strides = [1, 1]} : vector<10x10xf32> to vector<10x1xf32>
    %129 = vector.extract_strided_slice %75 {offsets = [8, 0], sizes = [1, 128], strides = [1, 1]} : vector<10x128xf32> to vector<1x128xf32>
    %130 = vector.broadcast %128 : vector<10x1xf32> to vector<10x128xf32>
    %131 = vector.broadcast %129 : vector<1x128xf32> to vector<10x128xf32>
    %132 = arith.mulf %130, %131 : vector<10x128xf32>
    %133 = arith.addf %127, %132 : vector<10x128xf32>
    %134 = vector.extract_strided_slice %76 {offsets = [0, 9], sizes = [10, 1], strides = [1, 1]} : vector<10x10xf32> to vector<10x1xf32>
    %135 = vector.extract_strided_slice %75 {offsets = [9, 0], sizes = [1, 128], strides = [1, 1]} : vector<10x128xf32> to vector<1x128xf32>
    %136 = vector.broadcast %134 : vector<10x1xf32> to vector<10x128xf32>
    %137 = vector.broadcast %135 : vector<1x128xf32> to vector<10x128xf32>
    %138 = arith.mulf %136, %137 : vector<10x128xf32>
    %139 = arith.addf %133, %138 : vector<10x128xf32>
    %cst_14 = arith.constant 0.000000e+00 : f32
    %140 = vector.broadcast %cst_14 : f32 to vector<10x128xf32>
    %141 = arith.maximumf %139, %140 : vector<10x128xf32>
    %c0_15 = arith.constant 0 : index
    %c0_16 = arith.constant 0 : index
    %142 = vector.load %arg8[%c0_15, %c0_16] : memref<10x1xf32, #tpu.memory_space<vmem>>, vector<10x1xf32>
    %143 = vector.broadcast %142 : vector<10x1xf32> to vector<10x128xf32>
    %144 = arith.mulf %143, %141 : vector<10x128xf32>
    %cst_17 = arith.constant dense<0.000000e+00> : vector<128xf32>
    %145 = vector.multi_reduction <add>, %144, %cst_17 [0] : vector<10x128xf32> to vector<128xf32>
    %146 = vector.shape_cast %145 : vector<128xf32> to vector<1x128xf32>
    %c0_18 = arith.constant 0 : index
    %c0_19 = arith.constant 0 : index
    %147 = vector.load %arg9[%c0_18, %c0_19] : memref<1x1xf32, #tpu.memory_space<vmem>>, vector<1x1xf32>
    %148 = vector.broadcast %147 : vector<1x1xf32> to vector<1x128xf32>
    %149 = arith.addf %146, %148 : vector<1x128xf32>
    %c0_20 = arith.constant 0 : index
    %c0_21 = arith.constant 0 : index
    %150 = vector.load %arg10[%c0_20, %c0_21] : memref<1x128xf32, #tpu.memory_space<vmem>>, vector<1x128xf32>
    tpu.vector_store %arg10[%c0_20, %c0_21], %149 {strides = array<i32>} : memref<1x128xf32, #tpu.memory_space<vmem>>, vector<1x128xf32>,
    return
  }
  func.func @transform_0(%arg0: i32) -> (i32, i32) {
    %c0_i32 = arith.constant 0 : i32
    %c0_i32_0 = arith.constant 0 : i32
    return %c0_i32, %arg0 : i32, i32
  }
  func.func @transform_1(%arg0: i32) -> (i32, i32) {
    %c0_i32 = arith.constant 0 : i32
    %c0_i32_0 = arith.constant 0 : i32
    %c0_i32_1 = arith.constant 0 : i32
    return %c0_i32, %c0_i32_0 : i32, i32
  }
  func.func @transform_2(%arg0: i32) -> (i32, i32) {
    %c0_i32 = arith.constant 0 : i32
    %c0_i32_0 = arith.constant 0 : i32
    %c0_i32_1 = arith.constant 0 : i32
    return %c0_i32, %c0_i32_0 : i32, i32
  }
  func.func @transform_3(%arg0: i32) -> (i32, i32) {
    %c0_i32 = arith.constant 0 : i32
    %c0_i32_0 = arith.constant 0 : i32
    %c0_i32_1 = arith.constant 0 : i32
    return %c0_i32, %c0_i32_0 : i32, i32
  }
  func.func @transform_4(%arg0: i32) -> (i32, i32) {
    %c0_i32 = arith.constant 0 : i32
    %c0_i32_0 = arith.constant 0 : i32
    %c0_i32_1 = arith.constant 0 : i32
    return %c0_i32, %c0_i32_0 : i32, i32
  }
  func.func @transform_5(%arg0: i32) -> (i32, i32) {
    %c0_i32 = arith.constant 0 : i32
    %c0_i32_0 = arith.constant 0 : i32
    %c0_i32_1 = arith.constant 0 : i32
    return %c0_i32, %c0_i32_0 : i32, i32
  }
  func.func @transform_6(%arg0: i32) -> (i32, i32) {
    %c0_i32 = arith.constant 0 : i32
    %c0_i32_0 = arith.constant 0 : i32
    %c0_i32_1 = arith.constant 0 : i32
    return %c0_i32, %c0_i32_0 : i32, i32
  }
  func.func @transform_7(%arg0: i32) -> (i32, i32) {
    %c0_i32 = arith.constant 0 : i32
    %c0_i32_0 = arith.constant 0 : i32
    %c0_i32_1 = arith.constant 0 : i32
    return %c0_i32, %c0_i32_0 : i32, i32
  }
  func.func @transform_8(%arg0: i32) -> (i32, i32) {
    %c0_i32 = arith.constant 0 : i32
    %c0_i32_0 = arith.constant 0 : i32
    %c0_i32_1 = arith.constant 0 : i32
    return %c0_i32, %c0_i32_0 : i32, i32
  }
  func.func @transform_9(%arg0: i32) -> (i32, i32) {
    %c0_i32 = arith.constant 0 : i32
    %c0_i32_0 = arith.constant 0 : i32
    return %c0_i32, %arg0 : i32, i32
  }
}

</mosaic_0001>

<llo_original>
// kernel: tpu_custom_call.1
$region0: #{tpu_custom_call.1}
  #allocation0 [shape = 'u32[]', space=smem, size = 0x4, offset = 0x4, fixed_abs, tag = 'smem constant byte address 0x4 - core index']
  #allocation1 [shape = 'u32[144,128]{1,0:T(1,128)}', space=vmem, size = 0x12000, scoped, tag = 'internal scratch']
  #allocation2 [shape = 'f32[1,1]{1,0:T(1,128)S(1)}', space=vmem, size = 0x200, scoped, tag = 'scoped memory for tpu_custom_call.1']
  %s0 = inlined_call_operand.vmem [shape: f32[1,128], index: 0, kind: input, shape index: {}]
  %s1 = inlined_call_operand.vmem [shape: f32[10,1], index: 1, kind: input, shape index: {}]
  %s2 = inlined_call_operand.vmem [shape: f32[10,1], index: 2, kind: input, shape index: {}]
  %s3 = inlined_call_operand.vmem [shape: f32[10,10], index: 3, kind: input, shape index: {}]
  %s4 = inlined_call_operand.vmem [shape: f32[10,1], index: 4, kind: input, shape index: {}]
  %s5 = inlined_call_operand.vmem [shape: f32[10,10], index: 5, kind: input, shape index: {}]
  %s6 = inlined_call_operand.vmem [shape: f32[10,1], index: 6, kind: input, shape index: {}]
  %s7 = inlined_call_operand.vmem [shape: f32[10,1], index: 7, kind: input, shape index: {}]
  %s8 = inlined_call_operand.<no memory space> [shape: f32[1,1], index: 8, kind: input, shape index: {}]
  %s9 = inlined_call_operand.hbm [shape: f32[1,128], index: 9, kind: output, shape index: {}]
  %s10 = sld [smem:[#allocation0]]
  $region46: #{tpu_custom_call.1} parent=0
    _
  %s12 = ssub.s32 1, %s10
  %s13 = scalar_select 0, %s12, %s10
  %v14 = vstv %s8
  %15 = vst [vmem:[#allocation2] sm:$0x1] %v14
  $region1: #{tpu_custom_call.1} parent=0
    #allocation3 [shape = 'u8[512]{0}', space=vmem, size = 0x400, scoped, tag = 'output window, operand 0, single buffered']
    #allocation4 [shape = 's32[1]{0}', space=sflag, size = 0x4, scoped, tag = 'scoped memory for tpu_custom_call.1']
    %16 = vsyncpa [#allocation4], 0
    // Predicated region
    $region2: #{tpu_custom_call.1} parent=1 // pred_check
      _
    $region3: #{tpu_custom_call.1} parent=1 // pred_check_branch
      %18 = sbr.rel (0) target = $region5
    $region4: #{tpu_custom_call.1} parent=1 // pred_region
      _
    $region5: #{tpu_custom_call.1} parent=1 // pred_fallthru
      _
    // Predicated region
    $region6: #{tpu_custom_call.1} parent=1 // pred_check
      _
    $region7: #{tpu_custom_call.1} parent=1 // pred_check_branch
      %20 = sbr.rel (0) target = $region9
    $region8: #{tpu_custom_call.1} parent=1 // pred_region
      _
    $region9: #{tpu_custom_call.1} parent=1 // pred_fallthru
      _
    // Predicated region
    $region10: #{tpu_custom_call.1} parent=1 // pred_check
      _
    $region11: #{tpu_custom_call.1} parent=1 // pred_check_branch
      %22 = sbr.rel (0) target = $region13
    $region12: #{tpu_custom_call.1} parent=1 // pred_region
      _
    $region13: #{tpu_custom_call.1} parent=1 // pred_fallthru
      _
    // Predicated region
    $region14: #{tpu_custom_call.1} parent=1 // pred_check
      _
    $region15: #{tpu_custom_call.1} parent=1 // pred_check_branch
      %24 = sbr.rel (0) target = $region17
    $region16: #{tpu_custom_call.1} parent=1 // pred_region
      _
    $region17: #{tpu_custom_call.1} parent=1 // pred_fallthru
      _
    // Predicated region
    $region18: #{tpu_custom_call.1} parent=1 // pred_check
      _
    $region19: #{tpu_custom_call.1} parent=1 // pred_check_branch
      %26 = sbr.rel (0) target = $region21
    $region20: #{tpu_custom_call.1} parent=1 // pred_region
      _
    $region21: #{tpu_custom_call.1} parent=1 // pred_fallthru
      _
    // Predicated region
    $region22: #{tpu_custom_call.1} parent=1 // pred_check
      _
    $region23: #{tpu_custom_call.1} parent=1 // pred_check_branch
      %28 = sbr.rel (0) target = $region25
    $region24: #{tpu_custom_call.1} parent=1 // pred_region
      _
    $region25: #{tpu_custom_call.1} parent=1 // pred_fallthru
      _
    // Predicated region
    $region26: #{tpu_custom_call.1} parent=1 // pred_check
      _
    $region27: #{tpu_custom_call.1} parent=1 // pred_check_branch
      %30 = sbr.rel (0) target = $region29
    $region28: #{tpu_custom_call.1} parent=1 // pred_region
      _
    $region29: #{tpu_custom_call.1} parent=1 // pred_fallthru
      _
    // Predicated region
    $region30: #{tpu_custom_call.1} parent=1 // pred_check
      _
    $region31: #{tpu_custom_call.1} parent=1 // pred_check_branch
      %32 = sbr.rel (0) target = $region33
    $region32: #{tpu_custom_call.1} parent=1 // pred_region
      _
    $region33: #{tpu_custom_call.1} parent=1 // pred_fallthru
      _
    // Predicated region
    $region34: #{tpu_custom_call.1} parent=1 // pred_check
      _
    $region35: #{tpu_custom_call.1} parent=1 // pred_check_branch
      %34 = sbr.rel (0) target = $region37
    $region36: #{tpu_custom_call.1} parent=1 // pred_region
      _
    $region37: #{tpu_custom_call.1} parent=1 // pred_fallthru
      _
    %v35 = vld [vmem:[%s0] sm:$0x1]
    %v36 = vld [vmem:[%s1] sm:$0xff]
    %v37 = vld [vmem:[%s1 + $0x8] sm:$0x3]
    %39 = vset.pattern.permute.xlu0 0
    %40 = vperm.xlu0 %39, %v36
    %v41 = vpop.permute.xlu0 %40
    %44 = vset.pattern.permute.xlu0 0
    %45 = vperm.xlu0 %44, %v37
    %v46 = vpop.permute.xlu0 %45
    %v49 = vlaneseq
    %v50 = vshrl.u32 %v49, 7
    %v51 = vsub.s32 0, %v50
    %v52 = vrot.slane %v35, %v51
    %v54 = vmul.f32 %v41, %v52
    %v55 = vmul.f32 %v46, %v52
    %v56 = vld [vmem:[%s2] sm:$0xff]
    %v57 = vld [vmem:[%s2 + $0x8] sm:$0x3]
    %59 = vset.pattern.permute.xlu0 0
    %60 = vperm.xlu0 %59, %v56
    %v61 = vpop.permute.xlu0 %60
    %64 = vset.pattern.permute.xlu0 0
    %65 = vperm.xlu0 %64, %v57
    %v66 = vpop.permute.xlu0 %65
    %v68 = vadd.f32 %v54, %v61
    %v69 = vadd.f32 %v55, %v66
    %v70 = vmax.f32 %v68, 0.0
    %v71 = vmax.f32 %v69, 0.0
    %v72 = vld [vmem:[%s3] sm:$0xff]
    %v73 = vld [vmem:[%s3 + $0x8] sm:$0x3]
    %v74 = vld [vmem:[%s4] sm:$0xff]
    %v75 = vld [vmem:[%s4 + $0x8] sm:$0x3]
    %77 = vset.pattern.permute.xlu0 0
    %78 = vperm.xlu0 %77, %v74
    %v79 = vpop.permute.xlu0 %78
    %82 = vset.pattern.permute.xlu0 0
    %83 = vperm.xlu0 %82, %v75
    %v84 = vpop.permute.xlu0 %83
    %87 = vset.pattern.permute.xlu0 0
    %88 = vperm.xlu0 %87, %v72
    %v89 = vpop.permute.xlu0 %88
    %92 = vset.pattern.permute.xlu0 0
    %93 = vperm.xlu0 %92, %v73
    %v94 = vpop.permute.xlu0 %93
    %v96 = vlaneseq
    %v97 = vshrl.u32 %v96, 7
    %v98 = vsub.s32 0, %v97
    %v99 = vrot.slane %v70, %v98
    %v100 = vmul.f32 %v89, %v99
    %v101 = vmul.f32 %v94, %v99
    %v102 = vadd.f32 %v79, %v100
    %v103 = vadd.f32 %v84, %v101
    %104 = vset.pattern.permute.xlu0 1
    %105 = vperm.xlu0 %104, %v72
    %v106 = vpop.permute.xlu0 %105
    %108 = vset.pattern.permute.xlu0 1
    %109 = vperm.xlu0 %108, %v73
    %v110 = vpop.permute.xlu0 %109
    %v112 = vlaneseq
    %v113 = vshrl.u32 %v112, 7
    %v114 = vsub.s32 1, %v113
    %v115 = vrot.slane %v70, %v114
    %v116 = vmul.f32 %v106, %v115
    %v117 = vmul.f32 %v110, %v115
    %v118 = vadd.f32 %v102, %v116
    %v119 = vadd.f32 %v103, %v117
    %120 = vset.pattern.permute.xlu0 2
    %121 = vperm.xlu0 %120, %v72
    %v122 = vpop.permute.xlu0 %121
    %124 = vset.pattern.permute.xlu0 2
    %125 = vperm.xlu0 %124, %v73
    %v126 = vpop.permute.xlu0 %125
    %v128 = vlaneseq
    %v129 = vshrl.u32 %v128, 7
    %v130 = vsub.s32 2, %v129
    %v131 = vrot.slane %v70, %v130
    %v132 = vmul.f32 %v122, %v131
    %v133 = vmul.f32 %v126, %v131
    %v134 = vadd.f32 %v118, %v132
    %v135 = vadd.f32 %v119, %v133
    %136 = vset.pattern.permute.xlu0 3
    %137 = vperm.xlu0 %136, %v72
    %v138 = vpop.permute.xlu0 %137
    %140 = vset.pattern.permute.xlu0 3
    %141 = vperm.xlu0 %140, %v73
    %v142 = vpop.permute.xlu0 %141
    %v144 = vlaneseq
    %v145 = vshrl.u32 %v144, 7
    %v146 = vsub.s32 3, %v145
    %v147 = vrot.slane %v70, %v146
    %v148 = vmul.f32 %v138, %v147
    %v149 = vmul.f32 %v142, %v147
    %v150 = vadd.f32 %v134, %v148
    %v151 = vadd.f32 %v135, %v149
    %152 = vset.pattern.permute.xlu0 4
    %153 = vperm.xlu0 %152, %v72
    %v154 = vpop.permute.xlu0 %153
    %156 = vset.pattern.permute.xlu0 4
    %157 = vperm.xlu0 %156, %v73
    %v158 = vpop.permute.xlu0 %157
    %v160 = vlaneseq
    %v161 = vshrl.u32 %v160, 7
    %v162 = vsub.s32 4, %v161
    %v163 = vrot.slane %v70, %v162
    %v164 = vmul.f32 %v154, %v163
    %v165 = vmul.f32 %v158, %v163
    %v166 = vadd.f32 %v150, %v164
    %v167 = vadd.f32 %v151, %v165
    %168 = vset.pattern.permute.xlu0 5
    %169 = vperm.xlu0 %168, %v72
    %v170 = vpop.permute.xlu0 %169
    %172 = vset.pattern.permute.xlu0 5
    %173 = vperm.xlu0 %172, %v73
    %v174 = vpop.permute.xlu0 %173
    %v176 = vlaneseq
    %v177 = vshrl.u32 %v176, 7
    %v178 = vsub.s32 5, %v177
    %v179 = vrot.slane %v70, %v178
    %v180 = vmul.f32 %v170, %v179
    %v181 = vmul.f32 %v174, %v179
    %v182 = vadd.f32 %v166, %v180
    %v183 = vadd.f32 %v167, %v181
    %184 = vset.pattern.permute.xlu0 6
    %185 = vperm.xlu0 %184, %v72
    %v186 = vpop.permute.xlu0 %185
    %188 = vset.pattern.permute.xlu0 6
    %189 = vperm.xlu0 %188, %v73
    %v190 = vpop.permute.xlu0 %189
    %v192 = vlaneseq
    %v193 = vshrl.u32 %v192, 7
    %v194 = vsub.s32 6, %v193
    %v195 = vrot.slane %v70, %v194
    %v196 = vmul.f32 %v186, %v195
    %v197 = vmul.f32 %v190, %v195
    %v198 = vadd.f32 %v182, %v196
    %v199 = vadd.f32 %v183, %v197
    %200 = vset.pattern.permute.xlu0 7
    %201 = vperm.xlu0 %200, %v72
    %v202 = vpop.permute.xlu0 %201
    %204 = vset.pattern.permute.xlu0 7
    %205 = vperm.xlu0 %204, %v73
    %v206 = vpop.permute.xlu0 %205
    %v208 = vlaneseq
    %v209 = vshrl.u32 %v208, 7
    %v210 = vsub.s32 7, %v209
    %v211 = vrot.slane %v70, %v210
    %v212 = vmul.f32 %v202, %v211
    %v213 = vmul.f32 %v206, %v211
    %v214 = vadd.f32 %v198, %v212
    %v215 = vadd.f32 %v199, %v213
    %216 = vset.pattern.permute.xlu0 8
    %217 = vperm.xlu0 %216, %v72
    %v218 = vpop.permute.xlu0 %217
    %220 = vset.pattern.permute.xlu0 8
    %221 = vperm.xlu0 %220, %v73
    %v222 = vpop.permute.xlu0 %221
    %v224 = vlaneseq
    %v225 = vshrl.u32 %v224, 7
    %v226 = vsub.s32 0, %v225
    %v227 = vrot.slane %v71, %v226
    %v228 = vmul.f32 %v218, %v227
    %v229 = vmul.f32 %v222, %v227
    %v230 = vadd.f32 %v214, %v228
    %v231 = vadd.f32 %v215, %v229
    %232 = vset.pattern.permute.xlu0 9
    %233 = vperm.xlu0 %232, %v72
    %v234 = vpop.permute.xlu0 %233
    %236 = vset.pattern.permute.xlu0 9
    %237 = vperm.xlu0 %236, %v73
    %v238 = vpop.permute.xlu0 %237
    %v240 = vlaneseq
    %v241 = vshrl.u32 %v240, 7
    %v242 = vsub.s32 1, %v241
    %v243 = vrot.slane %v71, %v242
    %v244 = vmul.f32 %v234, %v243
    %v245 = vmul.f32 %v238, %v243
    %v246 = vadd.f32 %v230, %v244
    %v247 = vadd.f32 %v231, %v245
    %v248 = vmax.f32 %v246, 0.0
    %v249 = vmax.f32 %v247, 0.0
    %v250 = vld [vmem:[%s5] sm:$0xff]
    %v251 = vld [vmem:[%s5 + $0x8] sm:$0x3]
    %v252 = vld [vmem:[%s6] sm:$0xff]
    %v253 = vld [vmem:[%s6 + $0x8] sm:$0x3]
    %255 = vset.pattern.permute.xlu0 0
    %256 = vperm.xlu0 %255, %v252
    %v257 = vpop.permute.xlu0 %256
    %260 = vset.pattern.permute.xlu0 0
    %261 = vperm.xlu0 %260, %v253
    %v262 = vpop.permute.xlu0 %261
    %265 = vset.pattern.permute.xlu0 0
    %266 = vperm.xlu0 %265, %v250
    %v267 = vpop.permute.xlu0 %266
    %270 = vset.pattern.permute.xlu0 0
    %271 = vperm.xlu0 %270, %v251
    %v272 = vpop.permute.xlu0 %271
    %v274 = vlaneseq
    %v275 = vshrl.u32 %v274, 7
    %v276 = vsub.s32 0, %v275
    %v277 = vrot.slane %v248, %v276
    %v278 = vmul.f32 %v267, %v277
    %v279 = vmul.f32 %v272, %v277
    %v280 = vadd.f32 %v257, %v278
    %v281 = vadd.f32 %v262, %v279
    %282 = vset.pattern.permute.xlu0 1
    %283 = vperm.xlu0 %282, %v250
    %v284 = vpop.permute.xlu0 %283
    %286 = vset.pattern.permute.xlu0 1
    %287 = vperm.xlu0 %286, %v251
    %v288 = vpop.permute.xlu0 %287
    %v290 = vlaneseq
    %v291 = vshrl.u32 %v290, 7
    %v292 = vsub.s32 1, %v291
    %v293 = vrot.slane %v248, %v292
    %v294 = vmul.f32 %v284, %v293
    %v295 = vmul.f32 %v288, %v293
    %v296 = vadd.f32 %v280, %v294
    %v297 = vadd.f32 %v281, %v295
    %298 = vset.pattern.permute.xlu0 2
    %299 = vperm.xlu0 %298, %v250
    %v300 = vpop.permute.xlu0 %299
    %302 = vset.pattern.permute.xlu0 2
    %303 = vperm.xlu0 %302, %v251
    %v304 = vpop.permute.xlu0 %303
    %v306 = vlaneseq
    %v307 = vshrl.u32 %v306, 7
    %v308 = vsub.s32 2, %v307
    %v309 = vrot.slane %v248, %v308
    %v310 = vmul.f32 %v300, %v309
    %v311 = vmul.f32 %v304, %v309
    %v312 = vadd.f32 %v296, %v310
    %v313 = vadd.f32 %v297, %v311
    %314 = vset.pattern.permute.xlu0 3
    %315 = vperm.xlu0 %314, %v250
    %v316 = vpop.permute.xlu0 %315
    %318 = vset.pattern.permute.xlu0 3
    %319 = vperm.xlu0 %318, %v251
    %v320 = vpop.permute.xlu0 %319
    %v322 = vlaneseq
    %v323 = vshrl.u32 %v322, 7
    %v324 = vsub.s32 3, %v323
    %v325 = vrot.slane %v248, %v324
    %v326 = vmul.f32 %v316, %v325
    %v327 = vmul.f32 %v320, %v325
    %v328 = vadd.f32 %v312, %v326
    %v329 = vadd.f32 %v313, %v327
    %330 = vset.pattern.permute.xlu0 4
    %331 = vperm.xlu0 %330, %v250
    %v332 = vpop.permute.xlu0 %331
    %334 = vset.pattern.permute.xlu0 4
    %335 = vperm.xlu0 %334, %v251
    %v336 = vpop.permute.xlu0 %335
    %v338 = vlaneseq
    %v339 = vshrl.u32 %v338, 7
    %v340 = vsub.s32 4, %v339
    %v341 = vrot.slane %v248, %v340
    %v342 = vmul.f32 %v332, %v341
    %v343 = vmul.f32 %v336, %v341
    %v344 = vadd.f32 %v328, %v342
    %v345 = vadd.f32 %v329, %v343
    %346 = vset.pattern.permute.xlu0 5
    %347 = vperm.xlu0 %346, %v250
    %v348 = vpop.permute.xlu0 %347
    %350 = vset.pattern.permute.xlu0 5
    %351 = vperm.xlu0 %350, %v251
    %v352 = vpop.permute.xlu0 %351
    %v354 = vlaneseq
    %v355 = vshrl.u32 %v354, 7
    %v356 = vsub.s32 5, %v355
    %v357 = vrot.slane %v248, %v356
    %v358 = vmul.f32 %v348, %v357
    %v359 = vmul.f32 %v352, %v357
    %v360 = vadd.f32 %v344, %v358
    %v361 = vadd.f32 %v345, %v359
    %362 = vset.pattern.permute.xlu0 6
    %363 = vperm.xlu0 %362, %v250
    %v364 = vpop.permute.xlu0 %363
    %366 = vset.pattern.permute.xlu0 6
    %367 = vperm.xlu0 %366, %v251
    %v368 = vpop.permute.xlu0 %367
    %v370 = vlaneseq
    %v371 = vshrl.u32 %v370, 7
    %v372 = vsub.s32 6, %v371
    %v373 = vrot.slane %v248, %v372
    %v374 = vmul.f32 %v364, %v373
    %v375 = vmul.f32 %v368, %v373
    %v376 = vadd.f32 %v360, %v374
    %v377 = vadd.f32 %v361, %v375
    %378 = vset.pattern.permute.xlu0 7
    %379 = vperm.xlu0 %378, %v250
    %v380 = vpop.permute.xlu0 %379
    %382 = vset.pattern.permute.xlu0 7
    %383 = vperm.xlu0 %382, %v251
    %v384 = vpop.permute.xlu0 %383
    %v386 = vlaneseq
    %v387 = vshrl.u32 %v386, 7
    %v388 = vsub.s32 7, %v387
    %v389 = vrot.slane %v248, %v388
    %v390 = vmul.f32 %v380, %v389
    %v391 = vmul.f32 %v384, %v389
    %v392 = vadd.f32 %v376, %v390
    %v393 = vadd.f32 %v377, %v391
    %394 = vset.pattern.permute.xlu0 8
    %395 = vperm.xlu0 %394, %v250
    %v396 = vpop.permute.xlu0 %395
    %398 = vset.pattern.permute.xlu0 8
    %399 = vperm.xlu0 %398, %v251
    %v400 = vpop.permute.xlu0 %399
    %v402 = vlaneseq
    %v403 = vshrl.u32 %v402, 7
    %v404 = vsub.s32 0, %v403
    %v405 = vrot.slane %v249, %v404
    %v406 = vmul.f32 %v396, %v405
    %v407 = vmul.f32 %v400, %v405
    %v408 = vadd.f32 %v392, %v406
    %v409 = vadd.f32 %v393, %v407
    %410 = vset.pattern.permute.xlu0 9
    %411 = vperm.xlu0 %410, %v250
    %v412 = vpop.permute.xlu0 %411
    %414 = vset.pattern.permute.xlu0 9
    %415 = vperm.xlu0 %414, %v251
    %v416 = vpop.permute.xlu0 %415
    %v418 = vlaneseq
    %v419 = vshrl.u32 %v418, 7
    %v420 = vsub.s32 1, %v419
    %v421 = vrot.slane %v249, %v420
    %v422 = vmul.f32 %v412, %v421
    %v423 = vmul.f32 %v416, %v421
    %v424 = vadd.f32 %v408, %v422
    %v425 = vadd.f32 %v409, %v423
    %v426 = vmax.f32 %v424, 0.0
    %v427 = vmax.f32 %v425, 0.0
    %v428 = vld [vmem:[%s7] sm:$0xff]
    %v429 = vld [vmem:[%s7 + $0x8] sm:$0x3]
    %431 = vset.pattern.permute.xlu0 0
    %432 = vperm.xlu0 %431, %v428
    %v433 = vpop.permute.xlu0 %432
    %436 = vset.pattern.permute.xlu0 0
    %437 = vperm.xlu0 %436, %v429
    %v438 = vpop.permute.xlu0 %437
    %v440 = vmul.f32 %v433, %v426
    %v441 = vmul.f32 %v438, %v427
    %vm442 = vcmask 1041408
    %v443 = vsel %vm442, %v441, 0.0
    %v444 = vadd.f32 %v440, %v443
    %v445 = vrot.slane %v444, 4
    %v446 = vadd.f32 %v444, %v445
    %v447 = vrot.slane %v446, 2
    %v448 = vadd.f32 %v446, %v447
    %v449 = vrot.slane %v448, 1
    %v450 = vadd.f32 %v448, %v449
    %v451 = vld [vmem:[#allocation2] sm:$0x1]
    %453 = vset.pattern.permute.xlu0 0
    %454 = vperm.xlu0 %453, %v451
    %v455 = vpop.permute.xlu0 %454
    %v457 = vlaneseq
    %v458 = vshrl.u32 %v457, 7
    %v459 = vsub.s32 0, %v458
    %v460 = vrot.slane %v455, %v459
    %v461 = vadd.f32 %v450, %v460
    %462 = vst [vmem:[#allocation3] sm:$0x1] %v461
    // Predicated region
    $region38: #{tpu_custom_call.1} parent=1 // pred_check
      _
    $region39: #{tpu_custom_call.1} parent=1 // pred_check_branch
      %464 = sbr.rel (0) target = $region41
    $region40: #{tpu_custom_call.1} parent=1 // pred_region
      %s466 = ssub.s32 16, 16
      %467 = vsyncadd [#allocation4], %s466
      %s469 = sshll.u32 [#allocation3], 4
      %s470 = int_to_ptr.vmem [resolvable:$true] %s469
      %472 = dma.vmem_to_hbm [thread:$0]  %s470, 16, %s9, [#allocation4]
    $region41: #{tpu_custom_call.1} parent=1 // pred_fallthru
      _
    // Predicated region
    $region42: #{tpu_custom_call.1} parent=1 // pred_check
      _
    $region43: #{tpu_custom_call.1} parent=1 // pred_check_branch
      %474 = sbr.rel (0) target = $region45
    $region44: #{tpu_custom_call.1} parent=1 // pred_region
      %475 = dma.done [#allocation4], 16
    $region45: #{tpu_custom_call.1} parent=1 // pred_fallthru
      _
    %476 = vsyncpa [#allocation4], 1

</llo_original>
